<compile_context>
chip_gen: v7x
topology: tpu7x:2x2x1
jax: 0.10.0
libtpu: 0.0.40
codegen_flags: <defaults>
</compile_context>

<pallas_src>
import jax
import jax.numpy as jnp
from jax.experimental import pallas as pl
from jax.experimental.pallas import tpu as pltpu


def _conv1x1_kernel(x_ref, w_ref, b_ref, o_ref):
    # x_ref: (Tn, c_in, T_hw)     w_ref: (T_co, c_in)
    # b_ref: (T_co, 1)            o_ref: (Tn, T_co, T_hw)
    acc = jnp.einsum(
        "oc,bcl->bol", w_ref[...], x_ref[...],
        preferred_element_type=jnp.float32,
    )
    acc = acc + b_ref[...][None]            # (1, T_co, 1) broadcast over lanes
    o_ref[...] = acc.astype(o_ref.dtype)


def _pick_tile_co(c_out, c_in, itemsize, max_w_bytes=4 << 20):
    """Tile the output-channel axis only when the double-buffered weight is big."""
    if 2 * c_out * c_in * itemsize <= max_w_bytes or c_out <= 8:
        return c_out
    max_rows = max(8, (max_w_bytes // max(2 * c_in * itemsize, 1)))
    tile = min(c_out, (max_rows // 8) * 8)
    while tile >= 8 and c_out % tile != 0:
        tile -= 8
    return tile if tile >= 8 else c_out


def _pick_tiling(N, c_in, c_out, tile_co, HW, itemsize, budget_bytes=20 << 20):
    """Choose (Tn, tile_hw) so the double-buffered working set fits the budget.

    Accounts for x/out double-buffers plus the weight/bias double-buffers.
    """
    fixed = 2 * (tile_co * c_in + tile_co) * itemsize        # weight + bias bufs
    per_col = 2 * (c_in + tile_co) * itemsize                # x + out bufs / column
    avail = max(budget_bytes - fixed, 2 * 128 * per_col)

    per_image = per_col * HW
    if per_image <= avail:
        # Fold batch: full HW per block, Tn images per grid step.
        max_tn = max(1, avail // per_image)
        if N >= 2:
            max_tn = min(max_tn, N // 2)     # keep >=2 steps for v7x megacore
        tn = 1
        for d in range(1, N + 1):
            if N % d == 0 and d <= max_tn:
                tn = d
        return tn, HW

    # Tile HW instead (one image per step).
    if HW <= 128 or HW % 128 != 0:
        return 1, HW                          # full-extent block is always legal
    max_cols = max(128, avail // per_col)
    tile = min(HW, (max_cols // 128) * 128)
    while HW % tile != 0:
        tile -= 128
    return 1, max(tile, 128)


def conv1x1_linear(x_nchw, weight, bias=None):
    """1x1 Conv2d forward in native NCHW.

    x_nchw: (N, c_in, H, W) float32
    weight: (c_out, c_in, 1, 1) float32 (PyTorch Conv2d layout)
    bias:   (c_out,) float32 or None
    returns (N, c_out, H, W) float32
    """
    N, c_in, H, W = x_nchw.shape
    c_out = weight.shape[0]
    HW = H * W
    itemsize = x_nchw.dtype.itemsize

    # Layout-preserving reshapes only — no transposes, no extra HBM pass.
    x3 = x_nchw.reshape(N, c_in, HW)
    w_mat = weight.reshape(c_out, c_in)
    if bias is None:
        bias = jnp.zeros((c_out,), dtype=x_nchw.dtype)
    b_col = bias.reshape(c_out, 1)

    tile_co = _pick_tile_co(c_out, c_in, itemsize)
    tn, tile_hw = _pick_tiling(N, c_in, c_out, tile_co, HW, itemsize)

    co_blocks = c_out // tile_co
    # If everything collapsed into a single step, split HW so both v7x TCs work.
    if (N // tn) * co_blocks * (HW // tile_hw) < 2 and tile_hw % 256 == 0:
        tile_hw //= 2

    grid = (N // tn, co_blocks, HW // tile_hw)

    cost = pl.CostEstimate(
        flops=2 * N * c_out * c_in * HW,
        bytes_accessed=(N * c_in * HW + N * c_out * HW
                        + c_out * c_in + c_out) * itemsize,
        transcendentals=0,
    )

    out3 = pl.pallas_call(
        _conv1x1_kernel,
        out_shape=jax.ShapeDtypeStruct((N, c_out, HW), x_nchw.dtype),
        grid_spec=pltpu.PrefetchScalarGridSpec(
            num_scalar_prefetch=0,
            grid=grid,
            in_specs=[
                pl.BlockSpec((tn, c_in, tile_hw), lambda n, o, j: (n, 0, j)),
                pl.BlockSpec((tile_co, c_in), lambda n, o, j: (o, 0)),
                pl.BlockSpec((tile_co, 1), lambda n, o, j: (o, 0)),
            ],
            out_specs=pl.BlockSpec((tn, tile_co, tile_hw),
                                   lambda n, o, j: (n, o, j)),
        ),
        compiler_params=pltpu.CompilerParams(
            dimension_semantics=("parallel", "parallel", "parallel"),
            vmem_limit_bytes=32 * 1024 * 1024,
        ),
        cost_estimate=cost,
    )(x3, w_mat, b_col)

    return out3.reshape(N, c_out, H, W)


if __name__ == "__main__":
    # Small shapes consistent with the module's forward (NCHW conv input).
    N, c_in, H, W = 2, 4, 16, 16
    c_out = 8

    key = jax.random.PRNGKey(0)
    kx, kw, kb = jax.random.split(key, 3)

    x = jax.random.normal(kx, (N, c_in, H, W), dtype=jnp.float32)

    # Deterministic parameter init mimicking Conv2d default (kaiming-uniform-ish).
    fan_in = c_in * 1 * 1
    bound = 1.0 / (fan_in ** 0.5)
    weight = jax.random.uniform(kw, (c_out, c_in, 1, 1), jnp.float32,
                                minval=-bound, maxval=bound)
    bias = jax.random.uniform(kb, (c_out,), jnp.float32,
                              minval=-bound, maxval=bound)

    out = jax.block_until_ready(conv1x1_linear(x, weight, bias))

    # Sanity check against a pure-JAX reference of the 1x1 conv.
    ref = jnp.einsum("nchw,oc->nohw", x, weight.reshape(c_out, c_in)) \
          + bias.reshape(1, c_out, 1, 1)
    assert out.shape == (N, c_out, H, W)
    assert jnp.allclose(out, ref, atol=1e-5, rtol=1e-5)

    print("KERNEL_OK")
</pallas_src>

<mosaic_0001>
module attributes {stable_mosaic.version = 11 : i64} {
  func.func @_conv1x1_kernel(%arg0: i32, %arg1: i32, %arg2: i32, %arg3: memref<1x4x256xf32, #tpu.memory_space<vmem>>, %arg4: memref<8x4xf32, #tpu.memory_space<vmem>>, %arg5: memref<8x1xf32, #tpu.memory_space<vmem>>, %arg6: memref<1x8x256xf32, #tpu.memory_space<vmem>>) attributes {dimension_semantics = [#tpu.dimension_semantics<parallel>, #tpu.dimension_semantics<parallel>, #tpu.dimension_semantics<parallel>], iteration_bounds = array<i64: 2, 1, 1>, scalar_prefetch = 0 : i64, scratch_operands = 0 : i64, tpu.core_type = #tpu.core_type<tc>, window_params = [{transform_indices = @transform_0, window_bounds = array<i64: 1, 4, 256>}, {transform_indices = @transform_1, window_bounds = array<i64: 8, 4>}, {transform_indices = @transform_2, window_bounds = array<i64: 8, 1>}, {transform_indices = @transform_3, window_bounds = array<i64: 1, 8, 256>}]} {
    %c0 = arith.constant 0 : index
    %c0_0 = arith.constant 0 : index
    %0 = vector.load %arg4[%c0, %c0_0] : memref<8x4xf32, #tpu.memory_space<vmem>>, vector<8x4xf32>
    %c0_1 = arith.constant 0 : index
    %c0_2 = arith.constant 0 : index
    %c0_3 = arith.constant 0 : index
    %1 = vector.load %arg3[%c0_1, %c0_2, %c0_3] : memref<1x4x256xf32, #tpu.memory_space<vmem>>, vector<1x4x256xf32>
    "tpu.trace_start"() <{level = 10 : i32, message = "oc,bcl->bol"}> : () -> ()
    %cst = arith.constant dense<0.000000e+00> : vector<1x256x8xf32>
    %2 = tpu.matmul %1, %0, %cst {dimension_numbers = #tpu.dot_dimension_numbers<[1], [1], [0, 2], [0], [0, 0, 0, 2, 1, 0], [], []>} : vector<1x4x256xf32>, vector<8x4xf32>, vector<1x256x8xf32> -> vector<1x256x8xf32>
    %3 = tpu.transpose %2, [0, 2, 1] : vector<1x256x8xf32> -> vector<1x8x256xf32>
    "tpu.trace_stop"() : () -> ()
    %c0_4 = arith.constant 0 : index
    %c0_5 = arith.constant 0 : index
    %4 = vector.load %arg5[%c0_4, %c0_5] : memref<8x1xf32, #tpu.memory_space<vmem>>, vector<8x1xf32>
    %5 = vector.shape_cast %4 : vector<8x1xf32> to vector<1x8x1xf32>
    %6 = vector.broadcast %5 : vector<1x8x1xf32> to vector<1x8x256xf32>
    %7 = arith.addf %3, %6 : vector<1x8x256xf32>
    %c0_6 = arith.constant 0 : index
    %c0_7 = arith.constant 0 : index
    %c0_8 = arith.constant 0 : index
    %8 = vector.load %arg6[%c0_6, %c0_7, %c0_8] : memref<1x8x256xf32, #tpu.memory_space<vmem>>, vector<1x8x256xf32>
    tpu.vector_store %arg6[%c0_6, %c0_7, %c0_8], %7 {strides = array<i32>} : memref<1x8x256xf32, #tpu.memory_space<vmem>>, vector<1x8x256xf32>,
    return
  }
  func.func @transform_0(%arg0: i32, %arg1: i32, %arg2: i32) -> (i32, i32, i32) {
    %c0_i32 = arith.constant 0 : i32
    %c0_i32_0 = arith.constant 0 : i32
    return %arg0, %c0_i32, %arg2 : i32, i32, i32
  }
  func.func @transform_1(%arg0: i32, %arg1: i32, %arg2: i32) -> (i32, i32) {
    %c0_i32 = arith.constant 0 : i32
    %c0_i32_0 = arith.constant 0 : i32
    return %arg1, %c0_i32 : i32, i32
  }
  func.func @transform_2(%arg0: i32, %arg1: i32, %arg2: i32) -> (i32, i32) {
    %c0_i32 = arith.constant 0 : i32
    %c0_i32_0 = arith.constant 0 : i32
    return %arg1, %c0_i32 : i32, i32
  }
  func.func @transform_3(%arg0: i32, %arg1: i32, %arg2: i32) -> (i32, i32, i32) {
    %c0_i32 = arith.constant 0 : i32
    return %arg0, %arg1, %arg2 : i32, i32, i32
  }
}

</mosaic_0001>

<llo_original>
// kernel: tpu_custom_call.1
$region0: #{tpu_custom_call.1}
  #allocation0 [shape = 'u32[]', space=smem, size = 0x4, offset = 0x4, fixed_abs, tag = 'smem constant byte address 0x4 - core index']
  #allocation1 [shape = 'u32[144,128]{1,0:T(1,128)}', space=vmem, size = 0x12000, scoped, tag = 'internal scratch']
  %s0 = inlined_call_operand.vmem [shape: f32[2,4,256], index: 0, kind: input, shape index: {}]
  %s1 = inlined_call_operand.vmem [shape: f32[8,4], index: 1, kind: input, shape index: {}]
  %s2 = inlined_call_operand.vmem [shape: f32[8,1], index: 2, kind: input, shape index: {}]
  %s3 = inlined_call_operand.hbm [shape: f32[2,8,256], index: 3, kind: output, shape index: {}]
  %s4 = sld [smem:[#allocation0]]
  $region45: #{tpu_custom_call.1} parent=0
    _
  %s6 = ssub.s32 1, %s4
  %s7 = scalar_select 0, %s6, %s4
  $region1: #{tpu_custom_call.1} parent=0
    #allocation2 [shape = 'u8[16384]{0}', space=vmem, size = 0x4000, scoped, tag = 'output window, operand 0']
    #allocation3 [shape = 's32[2]{0}', space=sflag, size = 0x8, scoped, tag = 'scoped memory for tpu_custom_call.1']
    %8 = vsyncpa [#allocation3], 0
    %s9 = scalar_lea.sflag [#allocation3], 1
    %10 = vsyncpa %s9, 0
    loop: start=0, step=1, limit=4
    $region2: #{tpu_custom_call.1} parent=1 // loop_pre_header
      _
    $region3: #{tpu_custom_call.1} parent=1 // loop_header
      %s12 = sphi 0, %s16
      %p13 = scmp.ge.s32.totalorder %s12, 4
      %s19 = sphi 0, %s38
      %s20 = sphi 0, %s34
      %s21 = sphi 0, %s30
      %s22 = sphi 0, %s19
      %s23 = sphi 0, %s20
      %s24 = sphi 0, %s21
      %s25 = sphi 0, %s22
      %s26 = sphi 0, %s23
      %s27 = sphi 0, %s24
      %s43 = sphi 0, %s45
      %s46 = sphi 0, %s43
      %s47 = sphi 0, %s46
      %s63 = sphi 0, %s47
      %s69 = sphi 0, %s71
      %s72 = sphi 0, %s69
      %s73 = sphi 0, %s72
      %s89 = sphi 0, %s73
      %s95 = sphi 0, %s97
      %s98 = sphi 0, %s95
      %s99 = sphi 0, %s98
      %s115 = sphi 0, %s99
      %s125 = sphi 0, %s127
      %s128 = sphi 0, %s125
      %s129 = sphi 0, %s128
      %s145 = sphi 0, %s129
    $region4: #{tpu_custom_call.1} parent=1 // loop_header_branch
      %15 = sbr.rel (%p13) target = $region8
    $region5: #{tpu_custom_call.1} parent=1 // loop_body
      %s17 = ssub.s32 %s12, 1
      %s18 = ssub.s32 %s12, 2
      %s28 = sadd.s32 1, %s21
      %p29 = scmp.ge.s32.totalorder %s28, 1
      %s30 = scalar_select %p29, 0, %s28
      %s31 = sadd.s32 1, %s20
      %s32 = scalar_select %p29, %s31, %s20
      %p33 = scmp.ge.s32.totalorder %s32, 1
      %s34 = scalar_select %p33, 0, %s32
      %s35 = sadd.s32 1, %s19
      %s36 = scalar_select %p33, %s35, %s19
      %p37 = scmp.ge.s32.totalorder %s36, 2
      %s38 = scalar_select %p37, 0, %s36
      %s39 = ssub.s32 %s19, %s38
      %s40 = ssub.s32 %s21, %s30
      %s41 = sor.u32 %s39, %s40
      %p42 = scmp.eq.s32.totalorder %s41, 0
      %s44 = sadd.s32 %s43, 1
      %s45 = scalar_select %p42, %s43, %s44
      %p48 = pneg %p42
      %p49 = scmp.eq.s32.totalorder %s12, 1
      %p50 = por %p48, %p49
      %p51 = scmp.ne.s32.totalorder %s43, %s46
      %p52 = scmp.eq.s32.totalorder %s12, 0
      %p53 = por %p51, %p52
      %p54 = scmp.ne.s32.totalorder %s43, %s46
      %p55 = scmp.eq.s32.totalorder %s17, 1
      %p56 = por %p54, %p55
      %p57 = scmp.ne.s32.totalorder %s46, %s47
      %p58 = scmp.eq.s32.totalorder %s17, 0
      %p59 = por %p57, %p58
      %p60 = scmp.ne.s32.totalorder %s46, %s47
      %p61 = scmp.eq.s32.totalorder %s18, 1
      %p62 = por %p60, %p61
      %p64 = scmp.ne.s32.totalorder %s47, %s63
      %p65 = scmp.eq.s32.totalorder %s18, 0
      %p66 = por %p64, %p65
      %s67 = ssub.s32 %s20, %s34
      %p68 = scmp.eq.s32.totalorder %s67, 0
      %s70 = sadd.s32 %s69, 1
      %s71 = scalar_select %p68, %s69, %s70
      %p74 = pneg %p68
      %p75 = scmp.eq.s32.totalorder %s12, 1
      %p76 = por %p74, %p75
      %p77 = scmp.ne.s32.totalorder %s69, %s72
      %p78 = scmp.eq.s32.totalorder %s12, 0
      %p79 = por %p77, %p78
      %p80 = scmp.ne.s32.totalorder %s69, %s72
      %p81 = scmp.eq.s32.totalorder %s17, 1
      %p82 = por %p80, %p81
      %p83 = scmp.ne.s32.totalorder %s72, %s73
      %p84 = scmp.eq.s32.totalorder %s17, 0
      %p85 = por %p83, %p84
      %p86 = scmp.ne.s32.totalorder %s72, %s73
      %p87 = scmp.eq.s32.totalorder %s18, 1
      %p88 = por %p86, %p87
      %p90 = scmp.ne.s32.totalorder %s73, %s89
      %p91 = scmp.eq.s32.totalorder %s18, 0
      %p92 = por %p90, %p91
      %s93 = ssub.s32 %s20, %s34
      %p94 = scmp.eq.s32.totalorder %s93, 0
      %s96 = sadd.s32 %s95, 1
      %s97 = scalar_select %p94, %s95, %s96
      %p100 = pneg %p94
      %p101 = scmp.eq.s32.totalorder %s12, 1
      %p102 = por %p100, %p101
      %p103 = scmp.ne.s32.totalorder %s95, %s98
      %p104 = scmp.eq.s32.totalorder %s12, 0
      %p105 = por %p103, %p104
      %p106 = scmp.ne.s32.totalorder %s95, %s98
      %p107 = scmp.eq.s32.totalorder %s17, 1
      %p108 = por %p106, %p107
      %p109 = scmp.ne.s32.totalorder %s98, %s99
      %p110 = scmp.eq.s32.totalorder %s17, 0
      %p111 = por %p109, %p110
      %p112 = scmp.ne.s32.totalorder %s98, %s99
      %p113 = scmp.eq.s32.totalorder %s18, 1
      %p114 = por %p112, %p113
      %p116 = scmp.ne.s32.totalorder %s99, %s115
      %p117 = scmp.eq.s32.totalorder %s18, 0
      %p118 = por %p116, %p117
      %s119 = ssub.s32 %s19, %s38
      %s120 = ssub.s32 %s20, %s34
      %s121 = sor.u32 %s119, %s120
      %s122 = ssub.s32 %s21, %s30
      %s123 = sor.u32 %s121, %s122
      %p124 = scmp.eq.s32.totalorder %s123, 0
      %s126 = sadd.s32 %s125, 1
      %s127 = scalar_select %p124, %s125, %s126
      %p130 = pneg %p124
      %p131 = scmp.eq.s32.totalorder %s12, 1
      %p132 = por %p130, %p131
      %p133 = scmp.ne.s32.totalorder %s125, %s128
      %p134 = scmp.eq.s32.totalorder %s12, 0
      %p135 = por %p133, %p134
      %p136 = scmp.ne.s32.totalorder %s125, %s128
      %p137 = scmp.eq.s32.totalorder %s17, 1
      %p138 = por %p136, %p137
      %p139 = scmp.ne.s32.totalorder %s128, %s129
      %p140 = scmp.eq.s32.totalorder %s17, 0
      %p141 = por %p139, %p140
      %p142 = scmp.ne.s32.totalorder %s128, %s129
      %p143 = scmp.eq.s32.totalorder %s18, 1
      %p144 = por %p142, %p143
      %p146 = scmp.ne.s32.totalorder %s129, %s145
      %p147 = scmp.eq.s32.totalorder %s18, 0
      %p148 = por %p146, %p147
      %p149 = scmp.le.s32.totalorder 1, %s12
      %p150 = scmp.lt.s32.totalorder %s12, 3
      %p151 = pnand %p149, %p150
      %p152 = pneg %p151
      // Predicated region
      $region9: #{tpu_custom_call.1} parent=5 // pred_check
        _
      $region10: #{tpu_custom_call.1} parent=5 // pred_check_branch
        %154 = sbr.rel (%p151) target = $region12
      $region11: #{tpu_custom_call.1} parent=5 // pred_region
        %s155 = ssub.s32 %s12, 1
        // Predicated region
        $region13: #{tpu_custom_call.1} parent=11 // pred_check
          %p156 = pneg %p85
        $region14: #{tpu_custom_call.1} parent=11 // pred_check_branch
          %158 = sbr.rel (%p156) target = $region16
        $region15: #{tpu_custom_call.1} parent=11 // pred_region
          %p159 = scmp.lt.s32.totalorder %s23, 0
          %s160 = scalar_select %p159, %s23, 0
          %s161 = smul.addr %s160, 8
          %s162 = scalar_lea.vmem %s1, %s161
        $region16: #{tpu_custom_call.1} parent=11 // pred_fallthru
          _
        // Predicated region
        $region17: #{tpu_custom_call.1} parent=11 // pred_check
          %p163 = pneg %p111
        $region18: #{tpu_custom_call.1} parent=11 // pred_check_branch
          %165 = sbr.rel (%p163) target = $region20
        $region19: #{tpu_custom_call.1} parent=11 // pred_region
          %p166 = scmp.lt.s32.totalorder %s23, 0
          %s167 = scalar_select %p166, %s23, 0
          %s168 = smul.addr %s167, 8
          %s169 = scalar_lea.vmem %s2, %s168
        $region20: #{tpu_custom_call.1} parent=11 // pred_fallthru
          _
      $region12: #{tpu_custom_call.1} parent=5 // pred_fallthru
        _
      %p170 = scmp.lt.s32.totalorder %s12, 2
      // Predicated region
      $region21: #{tpu_custom_call.1} parent=5 // pred_check
        %p171 = pneg %p170
      $region22: #{tpu_custom_call.1} parent=5 // pred_check_branch
        %173 = sbr.rel (%p171) target = $region24
      $region23: #{tpu_custom_call.1} parent=5 // pred_region
        // Predicated region
        $region25: #{tpu_custom_call.1} parent=23 // pred_check
          %p174 = pneg %p53
        $region26: #{tpu_custom_call.1} parent=23 // pred_check_branch
          %176 = sbr.rel (%p174) target = $region28
        $region27: #{tpu_custom_call.1} parent=23 // pred_region
          %s177 = smul.u32 2, %s21
          %p178 = scmp.lt.s32.totalorder %s19, 1
          %s179 = scalar_select %p178, %s19, 1
          %p180 = scmp.lt.s32.totalorder %s177, 1
          %s181 = scalar_select %p180, %s177, 1
          %s182 = smul.addr %s179, 2
          %s183 = sadd.s32 %s181, %s182
          %s184 = smul.addr %s183, 4
          %s185 = scalar_lea.vmem %s0, %s184
          %s186 = smul.u32 2, %s21
        $region28: #{tpu_custom_call.1} parent=23 // pred_fallthru
          _
      $region24: #{tpu_custom_call.1} parent=5 // pred_fallthru
        _
      %p187 = scmp.le.s32.totalorder 1, %s12
      %p188 = scmp.lt.s32.totalorder %s12, 3
      %p189 = pnand %p187, %p188
      %p190 = pneg %p189
      // Predicated region
      $region29: #{tpu_custom_call.1} parent=5 // pred_check
        _
      $region30: #{tpu_custom_call.1} parent=5 // pred_check_branch
        %192 = sbr.rel (%p189) target = $region32
      $region31: #{tpu_custom_call.1} parent=5 // pred_region
        %s193 = ssub.s32 %s12, 1
        %s194 = smul.u32 2, %s24
        %p195 = scmp.lt.s32.totalorder %s22, 1
        %s196 = scalar_select %p195, %s22, 1
        %p197 = scmp.lt.s32.totalorder %s194, 1
        %s198 = scalar_select %p197, %s194, 1
        %s199 = smul.addr %s196, 2
        %s200 = sadd.s32 %s198, %s199
        %s201 = smul.addr %s200, 4
        %s202 = scalar_lea.vmem %s0, %s201
        %p203 = pneg %p59
        %p204 = pneg %p56
        %p205 = scmp.lt.s32.totalorder %s23, 0
        %s206 = scalar_select %p205, %s23, 0
        %s207 = smul.addr %s206, 8
        %s208 = scalar_lea.vmem %s1, %s207
        %p209 = pneg %p85
        %p210 = pneg %p82
        %p211 = scmp.lt.s32.totalorder %s23, 0
        %s212 = scalar_select %p211, %s23, 0
        %s213 = smul.addr %s212, 8
        %s214 = scalar_lea.vmem %s2, %s213
        %p215 = pneg %p111
        %p216 = pneg %p108
        %p217 = pneg %p141
        %p218 = pneg %p138
        %s219 = sand.u32 %s128, 1
        %s220 = scalar_lea.sflag [#allocation3], %s219
        %s221 = sand.u32 %s128, 1
        %s222 = smul.addr %s221, 16
        %s223 = scalar_lea.vmem [#allocation2], %s222
        %s224 = smul.u32 2, %s24
        %p225 = scmp.lt.s32.totalorder %s22, 1
        %s226 = scalar_select %p225, %s22, 1
        %p227 = scmp.lt.s32.totalorder %s224, 1
        %s228 = scalar_select %p227, %s224, 1
        %s229 = smul.addr %s226, 2
        %s230 = sadd.s32 %s228, %s229
        %s231 = smul.addr %s230, 4
        %s232 = scalar_lea.vmem %s0, %s231
        %s233 = smul.u32 2, %s24
        %p234 = scmp.lt.s32.totalorder %s23, 0
        %s235 = scalar_select %p234, %s23, 0
        %s236 = smul.addr %s235, 8
        %s237 = scalar_lea.vmem %s1, %s236
        %p238 = scmp.lt.s32.totalorder %s23, 0
        %s239 = scalar_select %p238, %s23, 0
        %s240 = smul.addr %s239, 8
        %s241 = scalar_lea.vmem %s2, %s240
        %s242 = smul.u32 2, %s24
        %v243 = vld [vmem:[%s237] sm:$0xff]
        %v244 = vld [vmem:[%s232] sm:$0xff]
        %v246 = vcombine.high %v244, %v244
        %248 = vxpose.xlu0.b32.start [1/16] %v244, 128
        %249 = vxpose.xlu0.b32.cont [2/16] 0.0, 128
        %250 = vxpose.xlu0.b32.cont [3/16] 0.0, 128
        %251 = vxpose.xlu0.b32.cont [4/16] 0.0, 128
        %252 = vxpose.xlu0.b32.cont [5/16] 0.0, 128
        %253 = vxpose.xlu0.b32.cont [6/16] 0.0, 128
        %254 = vxpose.xlu0.b32.cont [7/16] 0.0, 128
        %255 = vxpose.xlu0.b32.cont [8/16] 0.0, 128
        %256 = vxpose.xlu0.b32.cont [9/16] 0.0, 128
        %257 = vxpose.xlu0.b32.cont [10/16] 0.0, 128
        %258 = vxpose.xlu0.b32.cont [11/16] 0.0, 128
        %259 = vxpose.xlu0.b32.cont [12/16] 0.0, 128
        %260 = vxpose.xlu0.b32.cont [13/16] 0.0, 128
        %261 = vxpose.xlu0.b32.cont [14/16] 0.0, 128
        %262 = vxpose.xlu0.b32.cont [15/16] 0.0, 128
        %263 = vxpose.xlu0.b32.end [16/16] 0.0, 128
        %v264 = vpop.trf.xlu0
        %v265 = vpop.trf.xlu0
        %v266 = vpop.trf.xlu0
        %v267 = vpop.trf.xlu0
        %v268 = vpop.trf.xlu0
        %v269 = vpop.trf.xlu0
        %v270 = vpop.trf.xlu0
        %v271 = vpop.trf.xlu0
        %v272 = vpop.trf.xlu0
        %v273 = vpop.trf.xlu0
        %v274 = vpop.trf.xlu0
        %v275 = vpop.trf.xlu0
        %v276 = vpop.trf.xlu0
        %v277 = vpop.trf.xlu0
        %v278 = vpop.trf.xlu0
        %v279 = vpop.trf.xlu0
        %280 = vxpose.xlu0.b32.start [1/16] %v246, 128
        %281 = vxpose.xlu0.b32.cont [2/16] 0.0, 128
        %282 = vxpose.xlu0.b32.cont [3/16] 0.0, 128
        %283 = vxpose.xlu0.b32.cont [4/16] 0.0, 128
        %284 = vxpose.xlu0.b32.cont [5/16] 0.0, 128
        %285 = vxpose.xlu0.b32.cont [6/16] 0.0, 128
        %286 = vxpose.xlu0.b32.cont [7/16] 0.0, 128
        %287 = vxpose.xlu0.b32.cont [8/16] 0.0, 128
        %288 = vxpose.xlu0.b32.cont [9/16] 0.0, 128
        %289 = vxpose.xlu0.b32.cont [10/16] 0.0, 128
        %290 = vxpose.xlu0.b32.cont [11/16] 0.0, 128
        %291 = vxpose.xlu0.b32.cont [12/16] 0.0, 128
        %292 = vxpose.xlu0.b32.cont [13/16] 0.0, 128
        %293 = vxpose.xlu0.b32.cont [14/16] 0.0, 128
        %294 = vxpose.xlu0.b32.cont [15/16] 0.0, 128
        %295 = vxpose.xlu0.b32.end [16/16] 0.0, 128
        %v296 = vpop.trf.xlu0
        %v297 = vpop.trf.xlu0
        %v298 = vpop.trf.xlu0
        %v299 = vpop.trf.xlu0
        %v300 = vpop.trf.xlu0
        %v301 = vpop.trf.xlu0
        %v302 = vpop.trf.xlu0
        %v303 = vpop.trf.xlu0
        %v304 = vpop.trf.xlu0
        %v305 = vpop.trf.xlu0
        %v306 = vpop.trf.xlu0
        %v307 = vpop.trf.xlu0
        %v308 = vpop.trf.xlu0
        %v309 = vpop.trf.xlu0
        %v310 = vpop.trf.xlu0
        %v311 = vpop.trf.xlu0
        %vm312 = vcmask 31744
        %v314 = vsel %vm312, %v264, 0
        %v317 = vsel %vm312, %v265, 0
        %v320 = vsel %vm312, %v266, 0
        %v323 = vsel %vm312, %v267, 0
        %v326 = vsel %vm312, %v268, 0
        %v329 = vsel %vm312, %v269, 0
        %v332 = vsel %vm312, %v270, 0
        %v335 = vsel %vm312, %v271, 0
        %v338 = vsel %vm312, %v272, 0
        %v341 = vsel %vm312, %v273, 0
        %v344 = vsel %vm312, %v274, 0
        %v347 = vsel %vm312, %v275, 0
        %v350 = vsel %vm312, %v276, 0
        %v353 = vsel %vm312, %v277, 0
        %v356 = vsel %vm312, %v278, 0
        %v359 = vsel %vm312, %v279, 0
        %v362 = vsel %vm312, %v296, 0
        %v365 = vsel %vm312, %v297, 0
        %v368 = vsel %vm312, %v298, 0
        %v371 = vsel %vm312, %v299, 0
        %v374 = vsel %vm312, %v300, 0
        %v377 = vsel %vm312, %v301, 0
        %v380 = vsel %vm312, %v302, 0
        %v383 = vsel %vm312, %v303, 0
        %v386 = vsel %vm312, %v304, 0
        %v389 = vsel %vm312, %v305, 0
        %v392 = vsel %vm312, %v306, 0
        %v395 = vsel %vm312, %v307, 0
        %v398 = vsel %vm312, %v308, 0
        %v401 = vsel %vm312, %v309, 0
        %v404 = vsel %vm312, %v310, 0
        %v407 = vsel %vm312, %v311, 0
        %v410 = vsel %vm312, %v243, 0
        %412 = vmatprep.subr.mxu0 0.0
        %413 = vmatpush1.xpose.msra.mxu0 %v410
        %414 = vmatprep.subr.mxu0 0.0
        %415 = vmatpush1.xpose.msra.mxu0 0.0
        %416 = vmatprep.subr.mxu0 0.0
        %417 = vmatpush1.xpose.msra.mxu0 0.0
        %418 = vmatprep.subr.mxu0 0.0
        %419 = vmatpush1.xpose.msra.mxu0 0.0
        %420 = vmatprep.subr.mxu0 0.0
        %421 = vmatpush1.xpose.msra.mxu0 0.0
        %422 = vmatprep.subr.mxu0 0.0
        %423 = vmatpush1.xpose.msra.mxu0 0.0
        %424 = vmatprep.subr.mxu0 0.0
        %425 = vmatpush1.xpose.msra.mxu0 0.0
        %426 = vmatprep.subr.mxu0 0.0
        %427 = vmatpush1.xpose.msra.mxu0 0.0
        %428 = vmatprep.subr.mxu0 0.0
        %429 = vmatpush1.xpose.msra.mxu0 0.0
        %430 = vmatprep.subr.mxu0 0.0
        %431 = vmatpush1.xpose.msra.mxu0 0.0
        %432 = vmatprep.subr.mxu0 0.0
        %433 = vmatpush1.xpose.msra.mxu0 0.0
        %434 = vmatprep.subr.mxu0 0.0
        %435 = vmatpush1.xpose.msra.mxu0 0.0
        %436 = vmatprep.subr.mxu0 0.0
        %437 = vmatpush1.xpose.msra.mxu0 0.0
        %438 = vmatprep.subr.mxu0 0.0
        %439 = vmatpush1.xpose.msra.mxu0 0.0
        %440 = vmatprep.subr.mxu0 0.0
        %441 = vmatpush1.xpose.msra.mxu0 0.0
        %442 = vmatprep.subr.mxu0 0.0
        %443 = vmatpush1.xpose.msra.mxu0 0.0
        %444 = vmatprep.subr.mxu0 0.0
        %445 = vmatpush1.xpose.msra.mxu0 0.0
        %446 = vmatprep.subr.mxu0 0.0
        %447 = vmatpush1.xpose.msra.mxu0 0.0
        %448 = vmatprep.subr.mxu0 0.0
        %449 = vmatpush1.xpose.msra.mxu0 0.0
        %450 = vmatprep.subr.mxu0 0.0
        %451 = vmatpush1.xpose.msra.mxu0 0.0
        %452 = vmatprep.subr.mxu0 0.0
        %453 = vmatpush1.xpose.msra.mxu0 0.0
        %454 = vmatprep.subr.mxu0 0.0
        %455 = vmatpush1.xpose.msra.mxu0 0.0
        %456 = vmatprep.subr.mxu0 0.0
        %457 = vmatpush1.xpose.msra.mxu0 0.0
        %458 = vmatprep.subr.mxu0 0.0
        %459 = vmatpush1.xpose.msra.mxu0 0.0
        %460 = vmatprep.subr.mxu0 0.0
        %461 = vmatpush1.xpose.msra.mxu0 0.0
        %462 = vmatprep.subr.mxu0 0.0
        %463 = vmatpush1.xpose.msra.mxu0 0.0
        %464 = vmatprep.subr.mxu0 0.0
        %465 = vmatpush1.xpose.msra.mxu0 0.0
        %466 = vmatprep.subr.mxu0 0.0
        %467 = vmatpush1.xpose.msra.mxu0 0.0
        %468 = vmatprep.subr.mxu0 0.0
        %469 = vmatpush1.xpose.msra.mxu0 0.0
        %470 = vmatprep.subr.mxu0 0.0
        %471 = vmatpush1.xpose.msra.mxu0 0.0
        %472 = vmatprep.subr.mxu0 0.0
        %473 = vmatpush1.xpose.msra.mxu0 0.0
        %474 = vmatprep.subr.mxu0 0.0
        %475 = vmatpush1.xpose.msra.mxu0 0.0
        %476 = vmatprep.mubr.f32.mxu0 0.0
        %477 = vmatmul.mubr.f32.gmra.mrb[0].mxu0 %v314
        %v478 = vpop.f32.mrb[0].mxu0
        %v479 = vadd.f32 0.0, %v478
        %v480 = vpop.f32.mrb[0].mxu0
        %481 = vmatprep.mubr.f32.mxu0 0.0
        %482 = vmatmul.mubr.f32.gmra.mrb[0].mxu0 %v317
        %v483 = vpop.f32.mrb[0].mxu0
        %v484 = vadd.f32 0.0, %v483
        %v485 = vpop.f32.mrb[0].mxu0
        %486 = vmatprep.mubr.f32.mxu0 0.0
        %487 = vmatmul.mubr.f32.gmra.mrb[0].mxu0 %v320
        %v488 = vpop.f32.mrb[0].mxu0
        %v489 = vadd.f32 0.0, %v488
        %v490 = vpop.f32.mrb[0].mxu0
        %491 = vmatprep.mubr.f32.mxu0 0.0
        %492 = vmatmul.mubr.f32.gmra.mrb[0].mxu0 %v323
        %v493 = vpop.f32.mrb[0].mxu0
        %v494 = vadd.f32 0.0, %v493
        %v495 = vpop.f32.mrb[0].mxu0
        %496 = vmatprep.mubr.f32.mxu0 0.0
        %497 = vmatmul.mubr.f32.gmra.mrb[0].mxu0 %v326
        %v498 = vpop.f32.mrb[0].mxu0
        %v499 = vadd.f32 0.0, %v498
        %v500 = vpop.f32.mrb[0].mxu0
        %501 = vmatprep.mubr.f32.mxu0 0.0
        %502 = vmatmul.mubr.f32.gmra.mrb[0].mxu0 %v329
        %v503 = vpop.f32.mrb[0].mxu0
        %v504 = vadd.f32 0.0, %v503
        %v505 = vpop.f32.mrb[0].mxu0
        %506 = vmatprep.mubr.f32.mxu0 0.0
        %507 = vmatmul.mubr.f32.gmra.mrb[0].mxu0 %v332
        %v508 = vpop.f32.mrb[0].mxu0
        %v509 = vadd.f32 0.0, %v508
        %v510 = vpop.f32.mrb[0].mxu0
        %511 = vmatprep.mubr.f32.mxu0 0.0
        %512 = vmatmul.mubr.f32.gmra.mrb[0].mxu0 %v335
        %v513 = vpop.f32.mrb[0].mxu0
        %v514 = vadd.f32 0.0, %v513
        %v515 = vpop.f32.mrb[0].mxu0
        %516 = vmatprep.mubr.f32.mxu0 0.0
        %517 = vmatmul.mubr.f32.gmra.mrb[0].mxu0 %v338
        %v518 = vpop.f32.mrb[0].mxu0
        %v519 = vadd.f32 0.0, %v518
        %v520 = vpop.f32.mrb[0].mxu0
        %521 = vmatprep.mubr.f32.mxu0 0.0
        %522 = vmatmul.mubr.f32.gmra.mrb[0].mxu0 %v341
        %v523 = vpop.f32.mrb[0].mxu0
        %v524 = vadd.f32 0.0, %v523
        %v525 = vpop.f32.mrb[0].mxu0
        %526 = vmatprep.mubr.f32.mxu0 0.0
        %527 = vmatmul.mubr.f32.gmra.mrb[0].mxu0 %v344
        %v528 = vpop.f32.mrb[0].mxu0
        %v529 = vadd.f32 0.0, %v528
        %v530 = vpop.f32.mrb[0].mxu0
        %531 = vmatprep.mubr.f32.mxu0 0.0
        %532 = vmatmul.mubr.f32.gmra.mrb[0].mxu0 %v347
        %v533 = vpop.f32.mrb[0].mxu0
        %v534 = vadd.f32 0.0, %v533
        %v535 = vpop.f32.mrb[0].mxu0
        %536 = vmatprep.mubr.f32.mxu0 0.0
        %537 = vmatmul.mubr.f32.gmra.mrb[0].mxu0 %v350
        %v538 = vpop.f32.mrb[0].mxu0
        %v539 = vadd.f32 0.0, %v538
        %v540 = vpop.f32.mrb[0].mxu0
        %541 = vmatprep.mubr.f32.mxu0 0.0
        %542 = vmatmul.mubr.f32.gmra.mrb[0].mxu0 %v353
        %v543 = vpop.f32.mrb[0].mxu0
        %v544 = vadd.f32 0.0, %v543
        %v545 = vpop.f32.mrb[0].mxu0
        %546 = vmatprep.mubr.f32.mxu0 0.0
        %547 = vmatmul.mubr.f32.gmra.mrb[0].mxu0 %v356
        %v548 = vpop.f32.mrb[0].mxu0
        %v549 = vadd.f32 0.0, %v548
        %v550 = vpop.f32.mrb[0].mxu0
        %551 = vmatprep.mubr.f32.mxu0 0.0
        %552 = vmatmul.mubr.f32.gmra.mrb[0].mxu0 %v359
        %v553 = vpop.f32.mrb[0].mxu0
        %v554 = vadd.f32 0.0, %v553
        %v555 = vpop.f32.mrb[0].mxu0
        %556 = vmatprep.mubr.f32.mxu0 0.0
        %557 = vmatmul.mubr.f32.gmra.mrb[0].mxu0 %v362
        %v558 = vpop.f32.mrb[0].mxu0
        %v559 = vadd.f32 0.0, %v558
        %v560 = vpop.f32.mrb[0].mxu0
        %561 = vmatprep.mubr.f32.mxu0 0.0
        %562 = vmatmul.mubr.f32.gmra.mrb[0].mxu0 %v365
        %v563 = vpop.f32.mrb[0].mxu0
        %v564 = vadd.f32 0.0, %v563
        %v565 = vpop.f32.mrb[0].mxu0
        %566 = vmatprep.mubr.f32.mxu0 0.0
        %567 = vmatmul.mubr.f32.gmra.mrb[0].mxu0 %v368
        %v568 = vpop.f32.mrb[0].mxu0
        %v569 = vadd.f32 0.0, %v568
        %v570 = vpop.f32.mrb[0].mxu0
        %571 = vmatprep.mubr.f32.mxu0 0.0
        %572 = vmatmul.mubr.f32.gmra.mrb[0].mxu0 %v371
        %v573 = vpop.f32.mrb[0].mxu0
        %v574 = vadd.f32 0.0, %v573
        %v575 = vpop.f32.mrb[0].mxu0
        %576 = vmatprep.mubr.f32.mxu0 0.0
        %577 = vmatmul.mubr.f32.gmra.mrb[0].mxu0 %v374
        %v578 = vpop.f32.mrb[0].mxu0
        %v579 = vadd.f32 0.0, %v578
        %v580 = vpop.f32.mrb[0].mxu0
        %581 = vmatprep.mubr.f32.mxu0 0.0
        %582 = vmatmul.mubr.f32.gmra.mrb[0].mxu0 %v377
        %v583 = vpop.f32.mrb[0].mxu0
        %v584 = vadd.f32 0.0, %v583
        %v585 = vpop.f32.mrb[0].mxu0
        %586 = vmatprep.mubr.f32.mxu0 0.0
        %587 = vmatmul.mubr.f32.gmra.mrb[0].mxu0 %v380
        %v588 = vpop.f32.mrb[0].mxu0
        %v589 = vadd.f32 0.0, %v588
        %v590 = vpop.f32.mrb[0].mxu0
        %591 = vmatprep.mubr.f32.mxu0 0.0
        %592 = vmatmul.mubr.f32.gmra.mrb[0].mxu0 %v383
        %v593 = vpop.f32.mrb[0].mxu0
        %v594 = vadd.f32 0.0, %v593
        %v595 = vpop.f32.mrb[0].mxu0
        %596 = vmatprep.mubr.f32.mxu0 0.0
        %597 = vmatmul.mubr.f32.gmra.mrb[0].mxu0 %v386
        %v598 = vpop.f32.mrb[0].mxu0
        %v599 = vadd.f32 0.0, %v598
        %v600 = vpop.f32.mrb[0].mxu0
        %601 = vmatprep.mubr.f32.mxu0 0.0
        %602 = vmatmul.mubr.f32.gmra.mrb[0].mxu0 %v389
        %v603 = vpop.f32.mrb[0].mxu0
        %v604 = vadd.f32 0.0, %v603
        %v605 = vpop.f32.mrb[0].mxu0
        %606 = vmatprep.mubr.f32.mxu0 0.0
        %607 = vmatmul.mubr.f32.gmra.mrb[0].mxu0 %v392
        %v608 = vpop.f32.mrb[0].mxu0
        %v609 = vadd.f32 0.0, %v608
        %v610 = vpop.f32.mrb[0].mxu0
        %611 = vmatprep.mubr.f32.mxu0 0.0
        %612 = vmatmul.mubr.f32.gmra.mrb[0].mxu0 %v395
        %v613 = vpop.f32.mrb[0].mxu0
        %v614 = vadd.f32 0.0, %v613
        %v615 = vpop.f32.mrb[0].mxu0
        %616 = vmatprep.mubr.f32.mxu0 0.0
        %617 = vmatmul.mubr.f32.gmra.mrb[0].mxu0 %v398
        %v618 = vpop.f32.mrb[0].mxu0
        %v619 = vadd.f32 0.0, %v618
        %v620 = vpop.f32.mrb[0].mxu0
        %621 = vmatprep.mubr.f32.mxu0 0.0
        %622 = vmatmul.mubr.f32.gmra.mrb[0].mxu0 %v401
        %v623 = vpop.f32.mrb[0].mxu0
        %v624 = vadd.f32 0.0, %v623
        %v625 = vpop.f32.mrb[0].mxu0
        %626 = vmatprep.mubr.f32.mxu0 0.0
        %627 = vmatmul.mubr.f32.gmra.mrb[0].mxu0 %v404
        %v628 = vpop.f32.mrb[0].mxu0
        %v629 = vadd.f32 0.0, %v628
        %v630 = vpop.f32.mrb[0].mxu0
        %631 = vmatprep.mubr.f32.mxu0 0.0
        %632 = vmatmul.mubr.f32.gmra.mrb[0].mxu0 %v407
        %v633 = vpop.f32.mrb[0].mxu0
        %v634 = vadd.f32 0.0, %v633
        %v635 = vpop.f32.mrb[0].mxu0
        %636 = vdwg.mxu0
        %637 = vxpose.xlu0.b32.start [1/16] %v479, 128
        %638 = vxpose.xlu0.b32.cont [2/16] %v484, 128
        %639 = vxpose.xlu0.b32.cont [3/16] %v489, 128
        %640 = vxpose.xlu0.b32.cont [4/16] %v494, 128
        %641 = vxpose.xlu0.b32.cont [5/16] %v499, 128
        %642 = vxpose.xlu0.b32.cont [6/16] %v504, 128
        %643 = vxpose.xlu0.b32.cont [7/16] %v509, 128
        %644 = vxpose.xlu0.b32.cont [8/16] %v514, 128
        %645 = vxpose.xlu0.b32.cont [9/16] %v519, 128
        %646 = vxpose.xlu0.b32.cont [10/16] %v524, 128
        %647 = vxpose.xlu0.b32.cont [11/16] %v529, 128
        %648 = vxpose.xlu0.b32.cont [12/16] %v534, 128
        %649 = vxpose.xlu0.b32.cont [13/16] %v539, 128
        %650 = vxpose.xlu0.b32.cont [14/16] %v544, 128
        %651 = vxpose.xlu0.b32.cont [15/16] %v549, 128
        %652 = vxpose.xlu0.b32.end [16/16] %v554, 128
        %v653 = vpop.trf.xlu0
        %v654 = vpop.trf.xlu0
        %v655 = vpop.trf.xlu0
        %v656 = vpop.trf.xlu0
        %v657 = vpop.trf.xlu0
        %v658 = vpop.trf.xlu0
        %v659 = vpop.trf.xlu0
        %v660 = vpop.trf.xlu0
        %v661 = vpop.trf.xlu0
        %v662 = vpop.trf.xlu0
        %v663 = vpop.trf.xlu0
        %v664 = vpop.trf.xlu0
        %v665 = vpop.trf.xlu0
        %v666 = vpop.trf.xlu0
        %v667 = vpop.trf.xlu0
        %v668 = vpop.trf.xlu0
        %669 = vxpose.xlu0.b32.start [1/16] %v559, 128
        %670 = vxpose.xlu0.b32.cont [2/16] %v564, 128
        %671 = vxpose.xlu0.b32.cont [3/16] %v569, 128
        %672 = vxpose.xlu0.b32.cont [4/16] %v574, 128
        %673 = vxpose.xlu0.b32.cont [5/16] %v579, 128
        %674 = vxpose.xlu0.b32.cont [6/16] %v584, 128
        %675 = vxpose.xlu0.b32.cont [7/16] %v589, 128
        %676 = vxpose.xlu0.b32.cont [8/16] %v594, 128
        %677 = vxpose.xlu0.b32.cont [9/16] %v599, 128
        %678 = vxpose.xlu0.b32.cont [10/16] %v604, 128
        %679 = vxpose.xlu0.b32.cont [11/16] %v609, 128
        %680 = vxpose.xlu0.b32.cont [12/16] %v614, 128
        %681 = vxpose.xlu0.b32.cont [13/16] %v619, 128
        %682 = vxpose.xlu0.b32.cont [14/16] %v624, 128
        %683 = vxpose.xlu0.b32.cont [15/16] %v629, 128
        %684 = vxpose.xlu0.b32.end [16/16] %v634, 128
        %v685 = vpop.trf.xlu0
        %v686 = vpop.trf.xlu0
        %v687 = vpop.trf.xlu0
        %v688 = vpop.trf.xlu0
        %v689 = vpop.trf.xlu0
        %v690 = vpop.trf.xlu0
        %v691 = vpop.trf.xlu0
        %v692 = vpop.trf.xlu0
        %v693 = vpop.trf.xlu0
        %v694 = vpop.trf.xlu0
        %v695 = vpop.trf.xlu0
        %v696 = vpop.trf.xlu0
        %v697 = vpop.trf.xlu0
        %v698 = vpop.trf.xlu0
        %v699 = vpop.trf.xlu0
        %v700 = vpop.trf.xlu0
        %v701 = vld [vmem:[%s241] sm:$0xff]
        %703 = vset.pattern.permute.xlu0 0
        %704 = vperm.xlu0 %703, %v701
        %v705 = vpop.permute.xlu0 %704
        %v707 = vadd.f32 %v653, %v705
        %v708 = vadd.f32 %v685, %v705
        %709 = vst [vmem:[%s223] sm:$0xff] %v707
        %710 = vst [vmem:[%s223 + $0x8] sm:$0xff] %v708
        %s711 = sand.u32 %s128, 1
        %s712 = scalar_lea.sflag [#allocation3], %s711
        %s713 = sand.u32 %s128, 1
        %s714 = smul.addr %s713, 16
        %s715 = scalar_lea.vmem [#allocation2], %s714
        // Predicated region
        $region33: #{tpu_custom_call.1} parent=31 // pred_check
          %p716 = pneg %p138
        $region34: #{tpu_custom_call.1} parent=31 // pred_check_branch
          %718 = sbr.rel (%p716) target = $region36
        $region35: #{tpu_custom_call.1} parent=31 // pred_region
          %s719 = smul.u32 2, %s24
          %s721 = ssub.s32 256, 256
          %722 = vsyncadd %s712, %s721
          %s723 = smul.addr %s23, 2
          %s724 = sadd.s32 %s719, %s723
          %s725 = smul.addr %s22, 2
          %s726 = sadd.s32 %s724, %s725
          %s727 = smul.addr %s726, 128
          %s728 = scalar_lea.hbm %s3, %s727
          %s730 = sshll.u32 %s715, 4
          %s731 = int_to_ptr.vmem [resolvable:$true] %s730
          %733 = dma.vmem_to_hbm [thread:$0]  %s731, 256, %s728, %s712
        $region36: #{tpu_custom_call.1} parent=31 // pred_fallthru
          _
      $region32: #{tpu_custom_call.1} parent=5 // pred_fallthru
        _
      %p734 = scmp.le.s32.totalorder 2, %s12
      // Predicated region
      $region37: #{tpu_custom_call.1} parent=5 // pred_check
        %p735 = pneg %p734
      $region38: #{tpu_custom_call.1} parent=5 // pred_check_branch
        %737 = sbr.rel (%p735) target = $region40
      $region39: #{tpu_custom_call.1} parent=5 // pred_region
        %s738 = ssub.s32 %s12, 2
        // Predicated region
        $region41: #{tpu_custom_call.1} parent=39 // pred_check
          %p739 = pneg %p144
        $region42: #{tpu_custom_call.1} parent=39 // pred_check_branch
          %741 = sbr.rel (%p739) target = $region44
        $region43: #{tpu_custom_call.1} parent=39 // pred_region
          %s742 = sand.u32 %s129, 1
          %s743 = scalar_lea.sflag [#allocation3], %s742
          %s744 = sand.u32 %s129, 1
          %s745 = smul.addr %s744, 16
          %s746 = scalar_lea.vmem [#allocation2], %s745
          %747 = dma.done %s743, 256
        $region44: #{tpu_custom_call.1} parent=39 // pred_fallthru
          _
      $region40: #{tpu_custom_call.1} parent=5 // pred_fallthru
        _
    $region6: #{tpu_custom_call.1} parent=1 // loop_footer
      %s16 = sadd.s32 1, %s12
    $region7: #{tpu_custom_call.1} parent=1 // loop_footer_branch
      %11 = sbr.rel target = $region3
    $region8: #{tpu_custom_call.1} parent=1 // loop_exit
      _
    %748 = vsyncpa [#allocation3], 1
    %s749 = scalar_lea.sflag [#allocation3], 1
    %750 = vsyncpa %s749, 1

</llo_original>
